<compile_context>
chip_gen: v5e
topology: v5e:2x2
jax: 0.10.0
libtpu: 0.0.40
codegen_flags: <defaults>
</compile_context>

<pallas_src>
import functools
import inspect

import jax
import jax.numpy as jnp
from jax.experimental import pallas as pl
from jax.experimental.pallas import tpu as pltpu

_LANE = 128
_SUBLANE = 8
_MAX_BLOCK_N = 4096  # review: raise the 512-row cap (amortize ~0.35 us/step)


def _round_up(x, m):
    return ((x + m - 1) // m) * m


def _vmem_capacity_bytes():
    """Generation-aware VMEM capacity (per TensorCore); conservative fallback."""
    try:
        return int(pltpu.get_tpu_info().vmem_capacity_bytes)
    except Exception:
        return 64 * 1024 * 1024  # v7x per-TC size == safe lower bound everywhere


def _supports_pipeline_mode():
    # pl.Buffered(1) single-buffers the constant-index weight/bias blocks
    # (their index_map is always (0, 0)), halving their resident VMEM
    # footprint.  Guarded so the script still builds on jax versions without
    # the pipeline_mode kwarg.
    try:
        return (hasattr(pl, "Buffered")
                and "pipeline_mode" in inspect.signature(pl.BlockSpec).parameters)
    except Exception:
        return False


_SINGLE_BUFFER_WEIGHTS = _supports_pipeline_mode()


def _resident_spec(shape):
    """BlockSpec for an operand that stays resident in VMEM for the whole grid."""
    if _SINGLE_BUFFER_WEIGHTS:
        return pl.BlockSpec(shape, lambda i: (0, 0), pipeline_mode=pl.Buffered(1))
    return pl.BlockSpec(shape, lambda i: (0, 0))


def _mlp_kernel(x_ref, w1_ref, b1_ref, w2_ref, b2_ref, w3_ref, b3_ref, o_ref):
    # Fused hot path: three bf16 MXU matmuls (f32 accumulation) with f32
    # bias-add / ReLU epilogues on the VPU, all resident in VMEM.
    x = x_ref[...].astype(w1_ref.dtype)               # f32 -> bf16 cast in-kernel
    h1 = jnp.dot(x, w1_ref[...], preferred_element_type=jnp.float32)
    h1 = jnp.maximum(h1 + b1_ref[...], 0.0)           # .clamp(min=0), f32 epilogue
    h2 = jnp.dot(h1.astype(w2_ref.dtype), w2_ref[...],
                 preferred_element_type=jnp.float32)
    h2 = jnp.maximum(h2 + b2_ref[...], 0.0)           # .clamp(min=0), f32 epilogue
    y = jnp.dot(h2.astype(w3_ref.dtype), w3_ref[...],
                preferred_element_type=jnp.float32) + b3_ref[...]
    o_ref[...] = y.astype(o_ref.dtype)                # unpadded (block_n, d_out) store


def prepare_params(w1, b1, w2, b2, w3, b3, *, compute_dtype=jnp.bfloat16):
    """Pad / cast the weights once, outside the per-call hot path.

    Hidden dims are zero-padded to lane multiples (exact: padded weights and
    biases are 0 and ReLU(0) = 0).  The output dim stays unpadded so the
    kernel writes exactly (n, d_out) bytes of output to HBM.
    """
    d_in, h1_dim = w1.shape
    h2_dim, d_out = w2.shape[1], w3.shape[1]
    h1_p = _round_up(h1_dim, _LANE)
    h2_p = _round_up(h2_dim, _LANE)

    def _bias2d(b, dim, pad):
        b = jnp.reshape(b, (1, dim)).astype(jnp.float32)   # accept (out,) or (1, out)
        return jnp.pad(b, ((0, 0), (0, pad)))

    w1p = jnp.pad(w1.astype(compute_dtype), ((0, 0), (0, h1_p - h1_dim)))
    w2p = jnp.pad(w2.astype(compute_dtype), ((0, h1_p - h1_dim), (0, h2_p - h2_dim)))
    w3p = jnp.pad(w3.astype(compute_dtype), ((0, h2_p - h2_dim), (0, 0)))
    b1p = _bias2d(b1, h1_dim, h1_p - h1_dim)
    b2p = _bias2d(b2, h2_dim, h2_p - h2_dim)
    b3p = _bias2d(b3, d_out, 0)
    return (w1p, b1p, w2p, b2p, w3p, b3p)


@functools.partial(jax.jit, static_argnames=("block_n",))
def three_layer_net(x, params, *, block_n=None):
    """Fused ((x @ W1 + b1).relu() @ W2 + b2).relu() @ W3 + b3 (params from prepare_params)."""
    w1p, b1p, w2p, b2p, w3p, b3p = params
    n, d_in = x.shape
    h1_p, h2_p, d_out = w1p.shape[1], w2p.shape[1], w3p.shape[1]
    assert w1p.shape[0] == d_in and w2p.shape[0] == h1_p and w3p.shape[0] == h2_p

    # ---- VMEM accounting (bytes).
    x_b = jnp.dtype(x.dtype).itemsize
    cdt_b = jnp.dtype(w1p.dtype).itemsize
    f32_b = 4
    wbuf = 1 if _SINGLE_BUFFER_WEIGHTS else 2      # resident blocks: 1x / 2x buffered
    weight_bytes = wbuf * ((d_in * h1_p + h1_p * h2_p + h2_p * d_out) * cdt_b
                           + (h1_p + h2_p + d_out) * f32_b)
    per_row_bytes = (2 * d_in * x_b                # x tile (double-buffered)
                     + d_in * cdt_b                # in-kernel bf16 copy of x
                     + 2 * d_out * x_b             # out tile (double-buffered)
                     + (h1_p + h2_p) * (f32_b + cdt_b)   # f32 + bf16 intermediates
                     + d_out * f32_b)              # pre-store f32 result

    capacity = _vmem_capacity_bytes()
    if block_n is None:
        budget = capacity // 2
        avail = budget - weight_bytes
        rows = avail // per_row_bytes if avail > 0 else _SUBLANE
        block_n = int(min(_MAX_BLOCK_N, max(_SUBLANE, rows), _round_up(n, _SUBLANE)))
        block_n = max(_SUBLANE, (block_n // _SUBLANE) * _SUBLANE)
        # Keep >= 2 grid steps when the batch allows it so the "parallel"
        # axis shards across both v7x TensorCores (harmless on v5e / v6e).
        if n >= 2 * _SUBLANE:
            block_n = min(block_n, _round_up(pl.cdiv(n, 2), _SUBLANE))
    # NOTE: if the padded weight set ever outgrows the VMEM budget (very wide
    # hidden layers), this fused kernel needs a K-tiled accumulator variant
    # (reduction grid axis + pl.when init/finalize). Not needed here.

    working_set = weight_bytes + block_n * per_row_bytes
    vmem_limit = int(min(3 * capacity // 4,
                         max(16 * 1024 * 1024, 2 * working_set)))

    grid = (pl.cdiv(n, block_n),)

    return pl.pallas_call(
        _mlp_kernel,
        out_shape=jax.ShapeDtypeStruct((n, d_out), x.dtype),
        grid_spec=pltpu.PrefetchScalarGridSpec(
            num_scalar_prefetch=0,
            grid=grid,
            in_specs=[
                pl.BlockSpec((block_n, d_in), lambda i: (i, 0)),  # x tile (streamed)
                _resident_spec((d_in, h1_p)),    # W1 (resident)
                _resident_spec((1, h1_p)),       # b1 (f32)
                _resident_spec((h1_p, h2_p)),    # W2 (resident)
                _resident_spec((1, h2_p)),       # b2 (f32)
                _resident_spec((h2_p, d_out)),   # W3 (resident, output dim unpadded)
                _resident_spec((1, d_out)),      # b3 (f32)
            ],
            out_specs=pl.BlockSpec((block_n, d_out), lambda i: (i, 0)),
        ),
        compiler_params=pltpu.CompilerParams(
            dimension_semantics=("parallel",),   # batch tiles shard across TCs
            vmem_limit_bytes=vmem_limit,
        ),
    )(x, w1p, b1p, w2p, b2p, w3p, b3p)


def _init_linear(key, fan_in, fan_out, dtype=jnp.float32):
    # Matches torch.nn.Linear default init: U(-1/sqrt(fan_in), 1/sqrt(fan_in)).
    # Weight stored as (in, out) = transpose of torch's (out, in); bias is 1-D.
    kw, kb = jax.random.split(key)
    bound = 1.0 / (fan_in ** 0.5)
    w = jax.random.uniform(kw, (fan_in, fan_out), dtype, -bound, bound)
    b = jax.random.uniform(kb, (fan_out,), dtype, -bound, bound)
    return w, b


if __name__ == "__main__":
    # Small shapes consistent with the module's forward: x is (N, D_in).
    N, D_in, H1, H2, D_out = 64, 32, 64, 32, 16

    key = jax.random.PRNGKey(0)
    kx, k1, k2, k3 = jax.random.split(key, 4)

    x = jax.random.normal(kx, (N, D_in), jnp.float32)
    w1, b1 = _init_linear(k1, D_in, H1)
    w2, b2 = _init_linear(k2, H1, H2)
    w3, b3 = _init_linear(k3, H2, D_out)

    # One-time weight preparation (pad + cast), outside the per-call hot path.
    params = jax.block_until_ready(prepare_params(w1, b1, w2, b2, w3, b3))

    y = three_layer_net(x, params)
    y = jax.block_until_ready(y)
    assert y.shape == (N, D_out)
    assert y.dtype == x.dtype

    # Reference using the same bf16-operand / f32-accumulate math as the kernel.
    c = jnp.bfloat16
    b1r, b2r, b3r = (jnp.reshape(b, (1, -1)) for b in (b1, b2, b3))
    h1_ref = jnp.maximum(
        jnp.dot(x.astype(c), w1.astype(c), preferred_element_type=jnp.float32) + b1r, 0.0)
    h2_ref = jnp.maximum(
        jnp.dot(h1_ref.astype(c), w2.astype(c), preferred_element_type=jnp.float32) + b2r, 0.0)
    y_ref = jnp.dot(h2_ref.astype(c), w3.astype(c), preferred_element_type=jnp.float32) + b3r
    assert jnp.allclose(y, y_ref, atol=1e-3, rtol=1e-3)

    # Loose sanity check against the full-f32 PyTorch math (bf16 MXU operands).
    h1_f = jnp.maximum(x @ w1 + b1r, 0.0)
    h2_f = jnp.maximum(h1_f @ w2 + b2r, 0.0)
    y_f = h2_f @ w3 + b3r
    assert jnp.allclose(y, y_f, atol=1e-1, rtol=1e-1)

    print("KERNEL_OK")
</pallas_src>

<mosaic_0001>
module attributes {stable_mosaic.version = 11 : i64} {
  func.func @_mlp_kernel(%arg0: i32, %arg1: memref<32x32xf32, #tpu.memory_space<vmem>>, %arg2: memref<32x128xbf16, #tpu.memory_space<vmem>>, %arg3: memref<1x128xf32, #tpu.memory_space<vmem>>, %arg4: memref<128x128xbf16, #tpu.memory_space<vmem>>, %arg5: memref<1x128xf32, #tpu.memory_space<vmem>>, %arg6: memref<128x16xbf16, #tpu.memory_space<vmem>>, %arg7: memref<1x16xf32, #tpu.memory_space<vmem>>, %arg8: memref<32x16xf32, #tpu.memory_space<vmem>>) attributes {dimension_semantics = [#tpu.dimension_semantics<parallel>], iteration_bounds = array<i64: 2>, scalar_prefetch = 0 : i64, scratch_operands = 0 : i64, tpu.core_type = #tpu.core_type<tc>, window_params = [{transform_indices = @transform_0, window_bounds = array<i64: 32, 32>}, {pipeline_mode = #tpu.pipeline_mode<synchronous>, transform_indices = @transform_1, window_bounds = array<i64: 32, 128>}, {pipeline_mode = #tpu.pipeline_mode<synchronous>, transform_indices = @transform_2, window_bounds = array<i64: 1, 128>}, {pipeline_mode = #tpu.pipeline_mode<synchronous>, transform_indices = @transform_3, window_bounds = array<i64: 128, 128>}, {pipeline_mode = #tpu.pipeline_mode<synchronous>, transform_indices = @transform_4, window_bounds = array<i64: 1, 128>}, {pipeline_mode = #tpu.pipeline_mode<synchronous>, transform_indices = @transform_5, window_bounds = array<i64: 128, 16>}, {pipeline_mode = #tpu.pipeline_mode<synchronous>, transform_indices = @transform_6, window_bounds = array<i64: 1, 16>}, {transform_indices = @transform_7, window_bounds = array<i64: 32, 16>}]} {
    %c0 = arith.constant 0 : index
    %c0_0 = arith.constant 0 : index
    %0 = vector.load %arg1[%c0, %c0_0] : memref<32x32xf32, #tpu.memory_space<vmem>>, vector<32x32xf32>
    %1 = arith.truncf %0 : vector<32x32xf32> to vector<32x32xbf16>
    %c0_1 = arith.constant 0 : index
    %c0_2 = arith.constant 0 : index
    %2 = vector.load %arg2[%c0_1, %c0_2] : memref<32x128xbf16, #tpu.memory_space<vmem>>, vector<32x128xbf16>
    %cst = arith.constant dense<0.000000e+00> : vector<32x128xf32>
    %3 = tpu.matmul %1, %2, %cst {dimension_numbers = #tpu.dot_dimension_numbers<[1], [0], [0], [1], [0, 0, 1, 1], [], []>} : vector<32x32xbf16>, vector<32x128xbf16>, vector<32x128xf32> -> vector<32x128xf32>
    %c0_3 = arith.constant 0 : index
    %c0_4 = arith.constant 0 : index
    %4 = vector.load %arg3[%c0_3, %c0_4] : memref<1x128xf32, #tpu.memory_space<vmem>>, vector<1x128xf32>
    %5 = vector.broadcast %4 : vector<1x128xf32> to vector<32x128xf32>
    %6 = arith.addf %3, %5 : vector<32x128xf32>
    %cst_5 = arith.constant 0.000000e+00 : f32
    %7 = vector.broadcast %cst_5 : f32 to vector<32x128xf32>
    %8 = arith.maximumf %6, %7 : vector<32x128xf32>
    %9 = arith.truncf %8 : vector<32x128xf32> to vector<32x128xbf16>
    %c0_6 = arith.constant 0 : index
    %c0_7 = arith.constant 0 : index
    %10 = vector.load %arg4[%c0_6, %c0_7] : memref<128x128xbf16, #tpu.memory_space<vmem>>, vector<128x128xbf16>
    %cst_8 = arith.constant dense<0.000000e+00> : vector<32x128xf32>
    %11 = tpu.matmul %9, %10, %cst_8 {dimension_numbers = #tpu.dot_dimension_numbers<[1], [0], [0], [1], [0, 0, 1, 1], [], []>} : vector<32x128xbf16>, vector<128x128xbf16>, vector<32x128xf32> -> vector<32x128xf32>
    %c0_9 = arith.constant 0 : index
    %c0_10 = arith.constant 0 : index
    %12 = vector.load %arg5[%c0_9, %c0_10] : memref<1x128xf32, #tpu.memory_space<vmem>>, vector<1x128xf32>
    %13 = vector.broadcast %12 : vector<1x128xf32> to vector<32x128xf32>
    %14 = arith.addf %11, %13 : vector<32x128xf32>
    %cst_11 = arith.constant 0.000000e+00 : f32
    %15 = vector.broadcast %cst_11 : f32 to vector<32x128xf32>
    %16 = arith.maximumf %14, %15 : vector<32x128xf32>
    %17 = arith.truncf %16 : vector<32x128xf32> to vector<32x128xbf16>
    %c0_12 = arith.constant 0 : index
    %c0_13 = arith.constant 0 : index
    %18 = vector.load %arg6[%c0_12, %c0_13] : memref<128x16xbf16, #tpu.memory_space<vmem>>, vector<128x16xbf16>
    %cst_14 = arith.constant dense<0.000000e+00> : vector<32x16xf32>
    %19 = tpu.matmul %17, %18, %cst_14 {dimension_numbers = #tpu.dot_dimension_numbers<[1], [0], [0], [1], [0, 0, 1, 1], [], []>} : vector<32x128xbf16>, vector<128x16xbf16>, vector<32x16xf32> -> vector<32x16xf32>
    %c0_15 = arith.constant 0 : index
    %c0_16 = arith.constant 0 : index
    %20 = vector.load %arg7[%c0_15, %c0_16] : memref<1x16xf32, #tpu.memory_space<vmem>>, vector<1x16xf32>
    %21 = vector.broadcast %20 : vector<1x16xf32> to vector<32x16xf32>
    %22 = arith.addf %19, %21 : vector<32x16xf32>
    %c0_17 = arith.constant 0 : index
    %c0_18 = arith.constant 0 : index
    %23 = vector.load %arg8[%c0_17, %c0_18] : memref<32x16xf32, #tpu.memory_space<vmem>>, vector<32x16xf32>
    tpu.vector_store %arg8[%c0_17, %c0_18], %22 {strides = array<i32>} : memref<32x16xf32, #tpu.memory_space<vmem>>, vector<32x16xf32>,
    return
  }
  func.func @transform_0(%arg0: i32) -> (i32, i32) {
    %c0_i32 = arith.constant 0 : i32
    %c0_i32_0 = arith.constant 0 : i32
    return %arg0, %c0_i32 : i32, i32
  }
  func.func @transform_1(%arg0: i32) -> (i32, i32) {
    %c0_i32 = arith.constant 0 : i32
    %c0_i32_0 = arith.constant 0 : i32
    %c0_i32_1 = arith.constant 0 : i32
    return %c0_i32, %c0_i32_0 : i32, i32
  }
  func.func @transform_2(%arg0: i32) -> (i32, i32) {
    %c0_i32 = arith.constant 0 : i32
    %c0_i32_0 = arith.constant 0 : i32
    %c0_i32_1 = arith.constant 0 : i32
    return %c0_i32, %c0_i32_0 : i32, i32
  }
  func.func @transform_3(%arg0: i32) -> (i32, i32) {
    %c0_i32 = arith.constant 0 : i32
    %c0_i32_0 = arith.constant 0 : i32
    %c0_i32_1 = arith.constant 0 : i32
    return %c0_i32, %c0_i32_0 : i32, i32
  }
  func.func @transform_4(%arg0: i32) -> (i32, i32) {
    %c0_i32 = arith.constant 0 : i32
    %c0_i32_0 = arith.constant 0 : i32
    %c0_i32_1 = arith.constant 0 : i32
    return %c0_i32, %c0_i32_0 : i32, i32
  }
  func.func @transform_5(%arg0: i32) -> (i32, i32) {
    %c0_i32 = arith.constant 0 : i32
    %c0_i32_0 = arith.constant 0 : i32
    %c0_i32_1 = arith.constant 0 : i32
    return %c0_i32, %c0_i32_0 : i32, i32
  }
  func.func @transform_6(%arg0: i32) -> (i32, i32) {
    %c0_i32 = arith.constant 0 : i32
    %c0_i32_0 = arith.constant 0 : i32
    %c0_i32_1 = arith.constant 0 : i32
    return %c0_i32, %c0_i32_0 : i32, i32
  }
  func.func @transform_7(%arg0: i32) -> (i32, i32) {
    %c0_i32 = arith.constant 0 : i32
    %c0_i32_0 = arith.constant 0 : i32
    return %arg0, %c0_i32 : i32, i32
  }
}

</mosaic_0001>

<llo_original>
// kernel: three_layer_net.1
$region0: #{three_layer_net.1}
  #allocation0 [shape = 'u32[]', space=smem, size = 0x4, offset = 0x4, fixed_abs, tag = 'smem constant byte address 0x4 - core index']
  #allocation1 [shape = 'u32[72,128]{1,0:T(1,128)}', space=vmem, size = 0x9000, scoped, tag = 'internal scratch']
  %s0 = inlined_call_operand.vmem [shape: f32[64,32], index: 0, kind: input, shape index: {}]
  %s1 = inlined_call_operand.vmem [shape: bf16[32,128], index: 1, kind: input, shape index: {}]
  %s2 = inlined_call_operand.vmem [shape: f32[1,128], index: 2, kind: input, shape index: {}]
  %s3 = inlined_call_operand.vmem [shape: bf16[128,128], index: 3, kind: input, shape index: {}]
  %s4 = inlined_call_operand.vmem [shape: f32[1,128], index: 4, kind: input, shape index: {}]
  %s5 = inlined_call_operand.vmem [shape: bf16[128,16], index: 5, kind: input, shape index: {}]
  %s6 = inlined_call_operand.vmem [shape: f32[1,16], index: 6, kind: input, shape index: {}]
  %s7 = inlined_call_operand.vmem [shape: f32[64,16], index: 7, kind: output, shape index: {}]
  %s8 = sld [smem:[#allocation0]]
  $region61: #{three_layer_net.1} parent=0
    _
  %s10 = ssub.s32 1, %s8
  %s11 = scalar_select 0, %s10, %s8
  loop: start=0, step=1, limit=4
  $region2: #{three_layer_net.1} parent=0 // loop_pre_header
    _
  $region3: #{three_layer_net.1} parent=0 // loop_header
    %s13 = sphi 0, %s17
    %p14 = scmp.ge.s32.totalorder %s13, 4
    %s23 = sphi 0, %s25
    %s26 = sphi 0, %s23
    %s27 = sphi 0, %s26
    %s43 = sphi 0, %s27
    %s47 = sphi 0, %s47
    %s49 = sphi 0, %s47
    %s50 = sphi 0, %s49
    %s64 = sphi 0, %s50
    %s68 = sphi 0, %s68
    %s70 = sphi 0, %s68
    %s71 = sphi 0, %s70
    %s85 = sphi 0, %s71
    %s89 = sphi 0, %s89
    %s91 = sphi 0, %s89
    %s92 = sphi 0, %s91
    %s106 = sphi 0, %s92
    %s110 = sphi 0, %s110
    %s112 = sphi 0, %s110
    %s113 = sphi 0, %s112
    %s127 = sphi 0, %s113
    %s131 = sphi 0, %s131
    %s133 = sphi 0, %s131
    %s134 = sphi 0, %s133
    %s148 = sphi 0, %s134
    %s152 = sphi 0, %s152
    %s154 = sphi 0, %s152
    %s155 = sphi 0, %s154
    %s169 = sphi 0, %s155
    %s175 = sphi 0, %s177
    %s178 = sphi 0, %s175
    %s179 = sphi 0, %s178
    %s195 = sphi 0, %s179
  $region4: #{three_layer_net.1} parent=0 // loop_header_branch
    %16 = sbr.rel (%p14) target = $region8
  $region5: #{three_layer_net.1} parent=0 // loop_body
    %s18 = ssub.s32 %s13, 1
    %s19 = ssub.s32 %s13, 2
    %s20 = sadd.s32 %s13, 1
    %s21 = ssub.s32 %s13, %s20
    %p22 = scmp.eq.s32.totalorder %s21, 0
    %s24 = sadd.s32 %s23, 1
    %s25 = scalar_select %p22, %s23, %s24
    %p28 = pneg %p22
    %p29 = scmp.eq.s32.totalorder %s13, 1
    %p30 = por %p28, %p29
    %p31 = scmp.ne.s32.totalorder %s23, %s26
    %p32 = scmp.eq.s32.totalorder %s13, 0
    %p33 = por %p31, %p32
    %p34 = scmp.ne.s32.totalorder %s23, %s26
    %p35 = scmp.eq.s32.totalorder %s18, 1
    %p36 = por %p34, %p35
    %p37 = scmp.ne.s32.totalorder %s26, %s27
    %p38 = scmp.eq.s32.totalorder %s18, 0
    %p39 = por %p37, %p38
    %p40 = scmp.ne.s32.totalorder %s26, %s27
    %p41 = scmp.eq.s32.totalorder %s19, 1
    %p42 = por %p40, %p41
    %p44 = scmp.ne.s32.totalorder %s27, %s43
    %p45 = scmp.eq.s32.totalorder %s19, 0
    %p46 = por %p44, %p45
    %s48 = sadd.s32 %s47, 1
    %p51 = scmp.eq.s32.totalorder %s13, 1
    %p52 = scmp.ne.s32.totalorder %s47, %s49
    %p53 = scmp.eq.s32.totalorder %s13, 0
    %p54 = por %p52, %p53
    %p55 = scmp.ne.s32.totalorder %s47, %s49
    %p56 = scmp.eq.s32.totalorder %s18, 1
    %p57 = por %p55, %p56
    %p58 = scmp.ne.s32.totalorder %s49, %s50
    %p59 = scmp.eq.s32.totalorder %s18, 0
    %p60 = por %p58, %p59
    %p61 = scmp.ne.s32.totalorder %s49, %s50
    %p62 = scmp.eq.s32.totalorder %s19, 1
    %p63 = por %p61, %p62
    %p65 = scmp.ne.s32.totalorder %s50, %s64
    %p66 = scmp.eq.s32.totalorder %s19, 0
    %p67 = por %p65, %p66
    %s69 = sadd.s32 %s68, 1
    %p72 = scmp.eq.s32.totalorder %s13, 1
    %p73 = scmp.ne.s32.totalorder %s68, %s70
    %p74 = scmp.eq.s32.totalorder %s13, 0
    %p75 = por %p73, %p74
    %p76 = scmp.ne.s32.totalorder %s68, %s70
    %p77 = scmp.eq.s32.totalorder %s18, 1
    %p78 = por %p76, %p77
    %p79 = scmp.ne.s32.totalorder %s70, %s71
    %p80 = scmp.eq.s32.totalorder %s18, 0
    %p81 = por %p79, %p80
    %p82 = scmp.ne.s32.totalorder %s70, %s71
    %p83 = scmp.eq.s32.totalorder %s19, 1
    %p84 = por %p82, %p83
    %p86 = scmp.ne.s32.totalorder %s71, %s85
    %p87 = scmp.eq.s32.totalorder %s19, 0
    %p88 = por %p86, %p87
    %s90 = sadd.s32 %s89, 1
    %p93 = scmp.eq.s32.totalorder %s13, 1
    %p94 = scmp.ne.s32.totalorder %s89, %s91
    %p95 = scmp.eq.s32.totalorder %s13, 0
    %p96 = por %p94, %p95
    %p97 = scmp.ne.s32.totalorder %s89, %s91
    %p98 = scmp.eq.s32.totalorder %s18, 1
    %p99 = por %p97, %p98
    %p100 = scmp.ne.s32.totalorder %s91, %s92
    %p101 = scmp.eq.s32.totalorder %s18, 0
    %p102 = por %p100, %p101
    %p103 = scmp.ne.s32.totalorder %s91, %s92
    %p104 = scmp.eq.s32.totalorder %s19, 1
    %p105 = por %p103, %p104
    %p107 = scmp.ne.s32.totalorder %s92, %s106
    %p108 = scmp.eq.s32.totalorder %s19, 0
    %p109 = por %p107, %p108
    %s111 = sadd.s32 %s110, 1
    %p114 = scmp.eq.s32.totalorder %s13, 1
    %p115 = scmp.ne.s32.totalorder %s110, %s112
    %p116 = scmp.eq.s32.totalorder %s13, 0
    %p117 = por %p115, %p116
    %p118 = scmp.ne.s32.totalorder %s110, %s112
    %p119 = scmp.eq.s32.totalorder %s18, 1
    %p120 = por %p118, %p119
    %p121 = scmp.ne.s32.totalorder %s112, %s113
    %p122 = scmp.eq.s32.totalorder %s18, 0
    %p123 = por %p121, %p122
    %p124 = scmp.ne.s32.totalorder %s112, %s113
    %p125 = scmp.eq.s32.totalorder %s19, 1
    %p126 = por %p124, %p125
    %p128 = scmp.ne.s32.totalorder %s113, %s127
    %p129 = scmp.eq.s32.totalorder %s19, 0
    %p130 = por %p128, %p129
    %s132 = sadd.s32 %s131, 1
    %p135 = scmp.eq.s32.totalorder %s13, 1
    %p136 = scmp.ne.s32.totalorder %s131, %s133
    %p137 = scmp.eq.s32.totalorder %s13, 0
    %p138 = por %p136, %p137
    %p139 = scmp.ne.s32.totalorder %s131, %s133
    %p140 = scmp.eq.s32.totalorder %s18, 1
    %p141 = por %p139, %p140
    %p142 = scmp.ne.s32.totalorder %s133, %s134
    %p143 = scmp.eq.s32.totalorder %s18, 0
    %p144 = por %p142, %p143
    %p145 = scmp.ne.s32.totalorder %s133, %s134
    %p146 = scmp.eq.s32.totalorder %s19, 1
    %p147 = por %p145, %p146
    %p149 = scmp.ne.s32.totalorder %s134, %s148
    %p150 = scmp.eq.s32.totalorder %s19, 0
    %p151 = por %p149, %p150
    %s153 = sadd.s32 %s152, 1
    %p156 = scmp.eq.s32.totalorder %s13, 1
    %p157 = scmp.ne.s32.totalorder %s152, %s154
    %p158 = scmp.eq.s32.totalorder %s13, 0
    %p159 = por %p157, %p158
    %p160 = scmp.ne.s32.totalorder %s152, %s154
    %p161 = scmp.eq.s32.totalorder %s18, 1
    %p162 = por %p160, %p161
    %p163 = scmp.ne.s32.totalorder %s154, %s155
    %p164 = scmp.eq.s32.totalorder %s18, 0
    %p165 = por %p163, %p164
    %p166 = scmp.ne.s32.totalorder %s154, %s155
    %p167 = scmp.eq.s32.totalorder %s19, 1
    %p168 = por %p166, %p167
    %p170 = scmp.ne.s32.totalorder %s155, %s169
    %p171 = scmp.eq.s32.totalorder %s19, 0
    %p172 = por %p170, %p171
    %s173 = ssub.s32 %s13, %s20
    %p174 = scmp.eq.s32.totalorder %s173, 0
    %s176 = sadd.s32 %s175, 1
    %s177 = scalar_select %p174, %s175, %s176
    %p180 = pneg %p174
    %p181 = scmp.eq.s32.totalorder %s13, 1
    %p182 = por %p180, %p181
    %p183 = scmp.ne.s32.totalorder %s175, %s178
    %p184 = scmp.eq.s32.totalorder %s13, 0
    %p185 = por %p183, %p184
    %p186 = scmp.ne.s32.totalorder %s175, %s178
    %p187 = scmp.eq.s32.totalorder %s18, 1
    %p188 = por %p186, %p187
    %p189 = scmp.ne.s32.totalorder %s178, %s179
    %p190 = scmp.eq.s32.totalorder %s18, 0
    %p191 = por %p189, %p190
    %p192 = scmp.ne.s32.totalorder %s178, %s179
    %p193 = scmp.eq.s32.totalorder %s19, 1
    %p194 = por %p192, %p193
    %p196 = scmp.ne.s32.totalorder %s179, %s195
    %p197 = scmp.eq.s32.totalorder %s19, 0
    %p198 = por %p196, %p197
    %p199 = scmp.le.s32.totalorder 1, %s13
    %p200 = scmp.lt.s32.totalorder %s13, 3
    %p201 = pnand %p199, %p200
    %p202 = pneg %p201
    // Predicated region
    $region9: #{three_layer_net.1} parent=5 // pred_check
      _
    $region10: #{three_layer_net.1} parent=5 // pred_check_branch
      %204 = sbr.rel (%p201) target = $region12
    $region11: #{three_layer_net.1} parent=5 // pred_region
      %s205 = ssub.s32 %s13, 1
      // Predicated region
      $region13: #{three_layer_net.1} parent=11 // pred_check
        %p206 = pneg %p60
      $region14: #{three_layer_net.1} parent=11 // pred_check_branch
        %208 = sbr.rel (%p206) target = $region16
      $region15: #{three_layer_net.1} parent=11 // pred_region
        _
      $region16: #{three_layer_net.1} parent=11 // pred_fallthru
        _
      // Predicated region
      $region17: #{three_layer_net.1} parent=11 // pred_check
        %p209 = pneg %p81
      $region18: #{three_layer_net.1} parent=11 // pred_check_branch
        %211 = sbr.rel (%p209) target = $region20
      $region19: #{three_layer_net.1} parent=11 // pred_region
        _
      $region20: #{three_layer_net.1} parent=11 // pred_fallthru
        _
      // Predicated region
      $region21: #{three_layer_net.1} parent=11 // pred_check
        %p212 = pneg %p102
      $region22: #{three_layer_net.1} parent=11 // pred_check_branch
        %214 = sbr.rel (%p212) target = $region24
      $region23: #{three_layer_net.1} parent=11 // pred_region
        _
      $region24: #{three_layer_net.1} parent=11 // pred_fallthru
        _
      // Predicated region
      $region25: #{three_layer_net.1} parent=11 // pred_check
        %p215 = pneg %p123
      $region26: #{three_layer_net.1} parent=11 // pred_check_branch
        %217 = sbr.rel (%p215) target = $region28
      $region27: #{three_layer_net.1} parent=11 // pred_region
        _
      $region28: #{three_layer_net.1} parent=11 // pred_fallthru
        _
      // Predicated region
      $region29: #{three_layer_net.1} parent=11 // pred_check
        %p218 = pneg %p144
      $region30: #{three_layer_net.1} parent=11 // pred_check_branch
        %220 = sbr.rel (%p218) target = $region32
      $region31: #{three_layer_net.1} parent=11 // pred_region
        _
      $region32: #{three_layer_net.1} parent=11 // pred_fallthru
        _
      // Predicated region
      $region33: #{three_layer_net.1} parent=11 // pred_check
        %p221 = pneg %p165
      $region34: #{three_layer_net.1} parent=11 // pred_check_branch
        %223 = sbr.rel (%p221) target = $region36
      $region35: #{three_layer_net.1} parent=11 // pred_region
        _
      $region36: #{three_layer_net.1} parent=11 // pred_fallthru
        _
    $region12: #{three_layer_net.1} parent=5 // pred_fallthru
      _
    %p224 = scmp.lt.s32.totalorder %s13, 2
    // Predicated region
    $region37: #{three_layer_net.1} parent=5 // pred_check
      %p225 = pneg %p224
    $region38: #{three_layer_net.1} parent=5 // pred_check_branch
      %227 = sbr.rel (%p225) target = $region40
    $region39: #{three_layer_net.1} parent=5 // pred_region
      // Predicated region
      $region41: #{three_layer_net.1} parent=39 // pred_check
        %p228 = pneg %p33
      $region42: #{three_layer_net.1} parent=39 // pred_check_branch
        %230 = sbr.rel (%p228) target = $region44
      $region43: #{three_layer_net.1} parent=39 // pred_region
        %s231 = smul.u32 4, %s13
        %p232 = scmp.lt.s32.totalorder %s231, 7
        %s233 = scalar_select %p232, %s231, 7
        %s234 = smul.addr %s233, 8
        %s235 = scalar_lea.vmem %s0, %s234
        %s236 = smul.u32 4, %s13
      $region44: #{three_layer_net.1} parent=39 // pred_fallthru
        _
    $region40: #{three_layer_net.1} parent=5 // pred_fallthru
      _
    %p237 = scmp.le.s32.totalorder 1, %s13
    %p238 = scmp.lt.s32.totalorder %s13, 3
    %p239 = pnand %p237, %p238
    %p240 = pneg %p239
    // Predicated region
    $region45: #{three_layer_net.1} parent=5 // pred_check
      _
    $region46: #{three_layer_net.1} parent=5 // pred_check_branch
      %242 = sbr.rel (%p239) target = $region48
    $region47: #{three_layer_net.1} parent=5 // pred_region
      %s243 = ssub.s32 %s13, 1
      %s244 = smul.u32 4, %s18
      %p245 = scmp.lt.s32.totalorder %s244, 7
      %s246 = scalar_select %p245, %s244, 7
      %s247 = smul.addr %s246, 8
      %s248 = scalar_lea.vmem %s0, %s247
      %p249 = pneg %p39
      %p250 = pneg %p36
      %p251 = pneg %p60
      %p252 = pneg %p57
      %p253 = pneg %p81
      %p254 = pneg %p78
      %p255 = pneg %p102
      %p256 = pneg %p99
      %p257 = pneg %p123
      %p258 = pneg %p120
      %p259 = pneg %p144
      %p260 = pneg %p141
      %p261 = pneg %p165
      %p262 = pneg %p162
      %p263 = pneg %p191
      %p264 = pneg %p188
      %s265 = smul.u32 4, %s18
      %p266 = scmp.lt.s32.totalorder %s265, 7
      %s267 = scalar_select %p266, %s265, 7
      %s268 = smul.addr %s267, 8
      %s269 = scalar_lea.vmem %s7, %s268
      %s270 = smul.u32 4, %s18
      %p271 = scmp.lt.s32.totalorder %s270, 7
      %s272 = scalar_select %p271, %s270, 7
      %s273 = smul.addr %s272, 8
      %s274 = scalar_lea.vmem %s0, %s273
      %s275 = smul.u32 4, %s18
      %s276 = smul.u32 4, %s18
      %p277 = scmp.lt.s32.totalorder %s276, 7
      %s278 = scalar_select %p277, %s276, 7
      %s279 = smul.addr %s278, 8
      %s280 = scalar_lea.vmem %s7, %s279
      %s281 = smul.u32 4, %s18
      %v283 = vld [vmem:[%s274] sm:$0xff]
      %v284 = vld [vmem:[%s274 + $0x8] sm:$0xff]
      %v285 = vld [vmem:[%s274 + $0x10] sm:$0xff]
      %v286 = vld [vmem:[%s274 + $0x18] sm:$0xff]
      %v287 = vpack.c.bf16 %v284, %v283
      %v288 = vpack.c.bf16 %v286, %v285
      %v289 = vld [vmem:[%s1] sm:$0xf]
      %v290 = vld [vmem:[%s1 + $0x4] sm:$0xf]
      %v291 = vld [vmem:[%s1 + $0x8] sm:$0xf]
      %v292 = vld [vmem:[%s1 + $0xc] sm:$0xf]
      %v293 = vld [vmem:[%s2] sm:$0x1]
      %v295 = vperm.slane %v293, 0
      %v301 = vunpack.c.l.b16 %v289
      %v302 = vunpack.c.l.b16 %v290
      %v303 = vunpack.c.l.b16 %v291
      %v304 = vunpack.c.l.b16 %v292
      %v305 = vpack.c.b16 %v302, %v301
      %v306 = vpack.c.b16 %v304, %v303
      %vm309 = vcmask 261120
      %v311 = vsel %vm309, %v287, 0
      %v314 = vsel %vm309, %v288, 0
      %316 = vmatpush.bf16.msra.mxu0 0
      %317 = vmatpush.bf16.msra.mxu0 0
      %318 = vmatpush.bf16.msra.mxu0 0
      %319 = vmatpush.bf16.msra.mxu0 0
      %320 = vmatpush.bf16.msra.mxu0 0
      %321 = vmatpush.bf16.msra.mxu0 0
      %322 = vmatpush.bf16.msra.mxu0 %v306
      %323 = vmatpush.bf16.msra.mxu0 %v305
      %324 = vmatmul.bf16.gmra.mxu0 %v311
      %v325 = vpop.f32.mrf.mxu0
      %v326 = vadd.f32 %v295, %v325
      %v327 = vpop.f32.mrf.mxu0
      %v328 = vadd.f32 %v295, %v327
      %329 = vmatmul.bf16.gmra.mxu0 %v314
      %v330 = vpop.f32.mrf.mxu0
      %v331 = vadd.f32 %v295, %v330
      %v332 = vpop.f32.mrf.mxu0
      %v333 = vadd.f32 %v295, %v332
      %334 = vdwg.mxu0
      %v335 = vmax.f32 %v326, 0.0
      %v336 = vmax.f32 %v328, 0.0
      %v337 = vmax.f32 %v331, 0.0
      %v338 = vmax.f32 %v333, 0.0
      %v339 = vpack.c.bf16 %v336, %v335
      %v340 = vpack.c.bf16 %v338, %v337
      %v341 = vld [vmem:[%s3] sm:$0xf]
      %v342 = vld [vmem:[%s3 + $0x4] sm:$0xf]
      %v343 = vld [vmem:[%s3 + $0x8] sm:$0xf]
      %v344 = vld [vmem:[%s3 + $0xc] sm:$0xf]
      %v345 = vld [vmem:[%s3 + $0x10] sm:$0xf]
      %v346 = vld [vmem:[%s3 + $0x14] sm:$0xf]
      %v347 = vld [vmem:[%s3 + $0x18] sm:$0xf]
      %v348 = vld [vmem:[%s3 + $0x1c] sm:$0xf]
      %v349 = vld [vmem:[%s3 + $0x20] sm:$0xf]
      %v350 = vld [vmem:[%s3 + $0x24] sm:$0xf]
      %v351 = vld [vmem:[%s3 + $0x28] sm:$0xf]
      %v352 = vld [vmem:[%s3 + $0x2c] sm:$0xf]
      %v353 = vld [vmem:[%s3 + $0x30] sm:$0xf]
      %v354 = vld [vmem:[%s3 + $0x34] sm:$0xf]
      %v355 = vld [vmem:[%s3 + $0x38] sm:$0xf]
      %v356 = vld [vmem:[%s3 + $0x3c] sm:$0xf]
      %v357 = vld [vmem:[%s4] sm:$0x1]
      %v359 = vperm.slane %v357, 0
      %v377 = vunpack.c.l.b16 %v341
      %v378 = vunpack.c.l.b16 %v342
      %v379 = vunpack.c.l.b16 %v343
      %v380 = vunpack.c.l.b16 %v344
      %v381 = vunpack.c.l.b16 %v345
      %v382 = vunpack.c.l.b16 %v346
      %v383 = vunpack.c.l.b16 %v347
      %v384 = vunpack.c.l.b16 %v348
      %v385 = vunpack.c.l.b16 %v349
      %v386 = vunpack.c.l.b16 %v350
      %v387 = vunpack.c.l.b16 %v351
      %v388 = vunpack.c.l.b16 %v352
      %v389 = vunpack.c.l.b16 %v353
      %v390 = vunpack.c.l.b16 %v354
      %v391 = vunpack.c.l.b16 %v355
      %v392 = vunpack.c.l.b16 %v356
      %v393 = vpack.c.b16 %v378, %v377
      %v394 = vpack.c.b16 %v380, %v379
      %v395 = vpack.c.b16 %v382, %v381
      %v396 = vpack.c.b16 %v384, %v383
      %v397 = vpack.c.b16 %v386, %v385
      %v398 = vpack.c.b16 %v388, %v387
      %v399 = vpack.c.b16 %v390, %v389
      %v400 = vpack.c.b16 %v392, %v391
      %409 = vmatpush.bf16.msra.mxu0 %v400
      %410 = vmatpush.bf16.msra.mxu0 %v399
      %411 = vmatpush.bf16.msra.mxu0 %v398
      %412 = vmatpush.bf16.msra.mxu0 %v397
      %413 = vmatpush.bf16.msra.mxu0 %v396
      %414 = vmatpush.bf16.msra.mxu0 %v395
      %415 = vmatpush.bf16.msra.mxu0 %v394
      %416 = vmatpush.bf16.msra.mxu0 %v393
      %417 = vmatmul.bf16.gmra.mxu0 %v339
      %v418 = vpop.f32.mrf.mxu0
      %v419 = vadd.f32 %v359, %v418
      %v420 = vpop.f32.mrf.mxu0
      %v421 = vadd.f32 %v359, %v420
      %422 = vmatmul.bf16.gmra.mxu0 %v340
      %v423 = vpop.f32.mrf.mxu0
      %v424 = vadd.f32 %v359, %v423
      %v425 = vpop.f32.mrf.mxu0
      %v426 = vadd.f32 %v359, %v425
      %427 = vdwg.mxu0
      %v428 = vmax.f32 %v419, 0.0
      %v429 = vmax.f32 %v421, 0.0
      %v430 = vmax.f32 %v424, 0.0
      %v431 = vmax.f32 %v426, 0.0
      %v432 = vpack.c.bf16 %v429, %v428
      %v433 = vpack.c.bf16 %v431, %v430
      %v434 = vld [vmem:[%s5] sm:$0xf]
      %v435 = vld [vmem:[%s5 + $0x4] sm:$0xf]
      %v436 = vld [vmem:[%s5 + $0x8] sm:$0xf]
      %v437 = vld [vmem:[%s5 + $0xc] sm:$0xf]
      %v438 = vld [vmem:[%s5 + $0x10] sm:$0xf]
      %v439 = vld [vmem:[%s5 + $0x14] sm:$0xf]
      %v440 = vld [vmem:[%s5 + $0x18] sm:$0xf]
      %v441 = vld [vmem:[%s5 + $0x1c] sm:$0xf]
      %v442 = vld [vmem:[%s5 + $0x20] sm:$0xf]
      %v443 = vld [vmem:[%s5 + $0x24] sm:$0xf]
      %v444 = vld [vmem:[%s5 + $0x28] sm:$0xf]
      %v445 = vld [vmem:[%s5 + $0x2c] sm:$0xf]
      %v446 = vld [vmem:[%s5 + $0x30] sm:$0xf]
      %v447 = vld [vmem:[%s5 + $0x34] sm:$0xf]
      %v448 = vld [vmem:[%s5 + $0x38] sm:$0xf]
      %v449 = vld [vmem:[%s5 + $0x3c] sm:$0xf]
      %v450 = vld [vmem:[%s6] sm:$0x1]
      %v452 = vperm.slane %v450, 0
      %v470 = vunpack.c.l.b16 %v434
      %v471 = vunpack.c.l.b16 %v435
      %v472 = vunpack.c.l.b16 %v436
      %v473 = vunpack.c.l.b16 %v437
      %v474 = vunpack.c.l.b16 %v438
      %v475 = vunpack.c.l.b16 %v439
      %v476 = vunpack.c.l.b16 %v440
      %v477 = vunpack.c.l.b16 %v441
      %v478 = vunpack.c.l.b16 %v442
      %v479 = vunpack.c.l.b16 %v443
      %v480 = vunpack.c.l.b16 %v444
      %v481 = vunpack.c.l.b16 %v445
      %v482 = vunpack.c.l.b16 %v446
      %v483 = vunpack.c.l.b16 %v447
      %v484 = vunpack.c.l.b16 %v448
      %v485 = vunpack.c.l.b16 %v449
      %v486 = vpack.c.b16 %v471, %v470
      %v487 = vpack.c.b16 %v473, %v472
      %v488 = vpack.c.b16 %v475, %v474
      %v489 = vpack.c.b16 %v477, %v476
      %v490 = vpack.c.b16 %v479, %v478
      %v491 = vpack.c.b16 %v481, %v480
      %v492 = vpack.c.b16 %v483, %v482
      %v493 = vpack.c.b16 %v485, %v484
      %502 = vmatpush.bf16.msra.mxu0 %v493
      %503 = vmatpush.bf16.msra.mxu0 %v492
      %504 = vmatpush.bf16.msra.mxu0 %v491
      %505 = vmatpush.bf16.msra.mxu0 %v490
      %506 = vmatpush.bf16.msra.mxu0 %v489
      %507 = vmatpush.bf16.msra.mxu0 %v488
      %508 = vmatpush.bf16.msra.mxu0 %v487
      %509 = vmatpush.bf16.msra.mxu0 %v486
      %510 = vmatmul.bf16.gmra.mxu0 %v432
      %v511 = vpop.f32.mrf.mxu0
      %v512 = vadd.f32 %v452, %v511
      %v513 = vpop.f32.mrf.mxu0
      %v514 = vadd.f32 %v452, %v513
      %515 = vmatmul.bf16.gmra.mxu0 %v433
      %v516 = vpop.f32.mrf.mxu0
      %v517 = vadd.f32 %v452, %v516
      %v518 = vpop.f32.mrf.mxu0
      %v519 = vadd.f32 %v452, %v518
      %520 = vdwg.mxu0
      %vm521 = vcmask 130048
      %522 = vst.msk [vmem:[%s280] sm:$0xff] %vm521, %v512
      %523 = vst.msk [vmem:[%s280 + $0x8] sm:$0xff] %vm521, %v514
      %524 = vst.msk [vmem:[%s280 + $0x10] sm:$0xff] %vm521, %v517
      %525 = vst.msk [vmem:[%s280 + $0x18] sm:$0xff] %vm521, %v519
      %s526 = smul.u32 4, %s18
      %p527 = scmp.lt.s32.totalorder %s526, 7
      %s528 = scalar_select %p527, %s526, 7
      %s529 = smul.addr %s528, 8
      %s530 = scalar_lea.vmem %s7, %s529
      // Predicated region
      $region49: #{three_layer_net.1} parent=47 // pred_check
        %p531 = pneg %p188
      $region50: #{three_layer_net.1} parent=47 // pred_check_branch
        %533 = sbr.rel (%p531) target = $region52
      $region51: #{three_layer_net.1} parent=47 // pred_region
        %s534 = smul.u32 4, %s18
      $region52: #{three_layer_net.1} parent=47 // pred_fallthru
        _
    $region48: #{three_layer_net.1} parent=5 // pred_fallthru
      _
    %p535 = scmp.le.s32.totalorder 2, %s13
    // Predicated region
    $region53: #{three_layer_net.1} parent=5 // pred_check
      %p536 = pneg %p535
    $region54: #{three_layer_net.1} parent=5 // pred_check_branch
      %538 = sbr.rel (%p536) target = $region56
    $region55: #{three_layer_net.1} parent=5 // pred_region
      %s539 = ssub.s32 %s13, 2
      // Predicated region
      $region57: #{three_layer_net.1} parent=55 // pred_check
        %p540 = pneg %p194
      $region58: #{three_layer_net.1} parent=55 // pred_check_branch
        %542 = sbr.rel (%p540) target = $region60
      $region59: #{three_layer_net.1} parent=55 // pred_region
        %s543 = smul.u32 4, %s19
        %p544 = scmp.lt.s32.totalorder %s543, 7
        %s545 = scalar_select %p544, %s543, 7
        %s546 = smul.addr %s545, 8
        %s547 = scalar_lea.vmem %s7, %s546
      $region60: #{three_layer_net.1} parent=55 // pred_fallthru
        _
    $region56: #{three_layer_net.1} parent=5 // pred_fallthru
      _
  $region6: #{three_layer_net.1} parent=0 // loop_footer
    %s17 = sadd.s32 1, %s13
  $region7: #{three_layer_net.1} parent=0 // loop_footer_branch
    %12 = sbr.rel target = $region3
  $region8: #{three_layer_net.1} parent=0 // loop_exit
    _

</llo_original>
